<compile_context>
chip_gen: v6e
topology: v6e:2x2x1
jax: 0.10.0
libtpu: 0.0.40
codegen_flags: <defaults>
</compile_context>

<pallas_src>
import functools

import jax
import jax.numpy as jnp
from jax import lax
from jax.experimental import pallas as pl
from jax.experimental.pallas import tpu as pltpu

_IGNORE_INDEX = -100  # nn.CrossEntropyLoss default


def _ce_stats_kernel(logits_ref, target_ref, loss_ref, psum_ref, pcnt_ref,
                     *, threshold, valid_hw):
    """Per-pixel cross-entropy + fused over-threshold statistics.

    Pixel axis is split (sublane, lane) = (T, 128); the class axis is a leading
    block dim, so every class lives in its own dense (8,128) vregs and the
    class reduction is pure VPU/EUP work (no cross-sublane traffic, no sublane
    padding waste for small C). Loss/target blocks are fully dense (dense vst).

    logits_ref: (1, C, T, 128)  native dtype (f32 or bf16)
    target_ref: (1, T, 128)     int32
    loss_ref  : (1, T, 128)     f32
    psum_ref  : (1, 1, 1, 128)  f32   per-tile partial sum of loss[loss > thr]
    pcnt_ref  : (1, 1, 1, 128)  int32 per-tile partial count of loss > thr
    """
    C = logits_ref.shape[1]
    tgt = target_ref[0]                                   # (T, 128)
    T, L = tgt.shape

    def cls_logit(c):
        # Load one class slice at a time: keeps in-kernel f32 temporaries at a
        # few (T,128) blocks instead of C of them (VMEM headroom on v7x).
        return logits_ref[0, c].astype(jnp.float32)       # (T, 128)

    # Pass 1: running max over classes (static unrolled loop, elementwise VPU).
    m = cls_logit(0)
    for c in range(1, C):
        m = jnp.maximum(m, cls_logit(c))

    # Pass 2: sum of exp(shifted) + gather of the target-class logit.
    sumexp = jnp.zeros_like(m)
    tgt_logit = jnp.zeros_like(m)
    for c in range(C):
        lc = cls_logit(c)
        sumexp = sumexp + jnp.exp(lc - m)
        tgt_logit = tgt_logit + jnp.where(tgt == c, lc, 0.0)

    loss = jnp.log(sumexp) + m - tgt_logit                # -log p[target]
    loss = jnp.where(tgt == _IGNORE_INDEX, 0.0, loss)     # PyTorch ignore_index
    loss_ref[0] = loss

    # Fused threshold statistics (saves a full HBM re-read of the loss array).
    # Mask out anything past the true pixel count: both the explicit
    # ignore-padding region and the OOB garbage of a partial last tile.
    pix = (pl.program_id(1) * (T * L)
           + lax.broadcasted_iota(jnp.int32, (T, L), 0) * L
           + lax.broadcasted_iota(jnp.int32, (T, L), 1))
    above = jnp.logical_and(loss > threshold, pix < valid_hw)
    psum_ref[0, 0] = jnp.sum(jnp.where(above, loss, 0.0), axis=0, keepdims=True)
    pcnt_ref[0, 0] = jnp.sum(above.astype(jnp.int32), axis=0, keepdims=True)


def _round_up(x, m):
    return (x + m - 1) // m * m


def per_pixel_ce_with_stats(output_nchw, target_nhw, threshold, *,
                            max_block_bytes=2 << 20,
                            min_grid_steps=8,
                            vmem_limit_bytes=32 * 1024 * 1024):
    """Per-pixel CE loss + global over-threshold sum/count.

    Returns (loss3 of shape (B, HW128//128, 128), sum_above, n_above, HW, HW128).
    """
    B, C, H, W = output_nchw.shape
    HW = H * W
    itemsize = jnp.dtype(output_nchw.dtype).itemsize      # bf16 halves the cap divisor

    # Pixel tile: multiple of 1024 (= 8 sublanes x 128 lanes) so every block is
    # sublane-dense. Capped so the native-dtype logits block <= max_block_bytes
    # and so there are at least ~min_grid_steps grid steps (megacore / pipeline).
    HW128 = _round_up(HW, 128)
    cap_pixels = max(1024, (max_block_bytes // (C * itemsize)) // 1024 * 1024)
    tiles_wanted = max(1, pl.cdiv(min_grid_steps, B))
    want_pixels = _round_up(pl.cdiv(HW128, tiles_wanted), 1024)
    tile = min(cap_pixels, want_pixels)
    if tile >= HW128:
        tile = HW128          # single full-extent block: always a legal block shape
    T = tile // 128
    P = HW128 // 128
    NT = pl.cdiv(P, T)        # partial last tile handled by in-kernel masking

    logits = output_nchw.reshape(B, C, HW)                 # free reshape, no transpose
    targets = target_nhw.reshape(B, HW).astype(jnp.int32)
    if HW128 != HW:
        # TODO(synk): padding to a lane multiple costs one extra HBM pass over
        # the logits; prefer crops with H*W % 128 == 0 in production.
        logits = jnp.pad(logits, ((0, 0), (0, 0), (0, HW128 - HW)))
        targets = jnp.pad(targets, ((0, 0), (0, HW128 - HW)),
                          constant_values=_IGNORE_INDEX)
    logits4 = logits.reshape(B, C, P, 128)                 # free reshape
    targets3 = targets.reshape(B, P, 128)

    kernel = functools.partial(_ce_stats_kernel,
                               threshold=float(threshold), valid_hw=HW)

    loss3, psum, pcnt = pl.pallas_call(
        kernel,
        out_shape=(
            jax.ShapeDtypeStruct((B, P, 128), jnp.float32),
            jax.ShapeDtypeStruct((B, NT, 1, 128), jnp.float32),
            jax.ShapeDtypeStruct((B, NT, 1, 128), jnp.int32),
        ),
        grid=(B, NT),
        in_specs=[
            pl.BlockSpec((1, C, T, 128), lambda b, j: (b, 0, j, 0)),
            pl.BlockSpec((1, T, 128), lambda b, j: (b, j, 0)),
        ],
        out_specs=(
            pl.BlockSpec((1, T, 128), lambda b, j: (b, j, 0)),
            pl.BlockSpec((1, 1, 1, 128), lambda b, j: (b, j, 0, 0)),
            pl.BlockSpec((1, 1, 1, 128), lambda b, j: (b, j, 0, 0)),
        ),
        compiler_params=pltpu.CompilerParams(
            dimension_semantics=("parallel", "parallel"),
            vmem_limit_bytes=vmem_limit_bytes,
        ),
    )(logits4, targets3)

    # Tiny (B * NT * 128)-element reductions; the branch decision is now scalar.
    sum_above = jnp.sum(psum)
    n_above = jnp.sum(pcnt)
    return loss3, sum_above, n_above, HW, HW128


def ohem_cross_entropy_loss(output_nchw, target_nhw, *, threshold, keep_num,
                            approx_topk=False):
    """Matches OHEM_CrossEntroy_Loss.forward semantics."""
    loss3, sum_above, n_above, HW, HW128 = per_pixel_ce_with_stats(
        output_nchw, target_nhw, threshold)
    B = loss3.shape[0]
    n = B * HW
    if keep_num >= n:
        raise ValueError(f"keep_num ({keep_num}) must be < number of pixels ({n})")

    # torch:  sorted_desc[keep_num] > threshold
    #   <=>   count(loss > threshold) >= keep_num + 1   (strict > on both sides)
    # so no sort / top_k is needed to pick the branch.
    take_above = n_above >= (keep_num + 1)

    # Branch 1: loss[loss > threshold].mean() — fully fused into the kernel.
    # (max(n_above, 1) is never active when this branch is selected.)
    mean_above = sum_above / jnp.maximum(n_above.astype(jnp.float32), 1.0)

    def _topk_mean():
        # Branch 2: mean of the keep_num largest losses. Only executed when the
        # count-based condition selects it (the common case skips it entirely).
        loss_flat = loss3.reshape(B, HW128)[:, :HW].reshape(-1)   # drop padding
        if approx_topk:
            vals, _ = lax.approx_max_k(loss_flat, keep_num)  # TPU partial-reduce path
        else:
            vals, _ = lax.top_k(loss_flat, keep_num)
        return jnp.mean(vals)

    return lax.cond(take_above, lambda: mean_above, _topk_mean)


if __name__ == "__main__":
    key = jax.random.PRNGKey(0)
    k1, k2, k3, k4 = jax.random.split(key, 4)

    def reference(output, target, threshold, keep_num):
        _, C, _, _ = output.shape
        lf = jnp.transpose(output, (0, 2, 3, 1)).reshape(-1, C).astype(jnp.float32)
        tf = target.reshape(-1)
        logp = jax.nn.log_softmax(lf, axis=-1)
        loss = -jnp.take_along_axis(logp, tf[:, None], axis=1)[:, 0]
        loss = jnp.where(tf == _IGNORE_INDEX, 0.0, loss)
        s = jnp.sort(loss)[::-1]
        above = loss > threshold
        mean_above = (jnp.sum(jnp.where(above, loss, 0.0))
                      / jnp.maximum(jnp.sum(above.astype(jnp.float32)), 1.0))
        return jnp.where(s[keep_num] > threshold, mean_above, jnp.mean(s[:keep_num]))

    # Case 1: above-threshold branch, HW a multiple of 128.
    B, C, H, W = 2, 4, 16, 16
    out1 = jax.random.normal(k1, (B, C, H, W), dtype=jnp.float32)
    tgt1 = jax.random.randint(k2, (B, H, W), 0, C, dtype=jnp.int32)
    got1 = jax.jit(lambda o, t: ohem_cross_entropy_loss(
        o, t, threshold=0.7, keep_num=100))(out1, tgt1)
    jax.block_until_ready(got1)
    ref1 = reference(out1, tgt1, 0.7, 100)
    assert jnp.allclose(got1, ref1, atol=1e-5, rtol=1e-5), (got1, ref1)

    # Case 2: top-k branch + HW not a multiple of 128 (padding / masking path).
    B, C, H, W = 2, 4, 15, 15
    out2 = jax.random.normal(k3, (B, C, H, W), dtype=jnp.float32)
    tgt2 = jax.random.randint(k4, (B, H, W), 0, C, dtype=jnp.int32)
    got2 = jax.jit(lambda o, t: ohem_cross_entropy_loss(
        o, t, threshold=5.0, keep_num=100))(out2, tgt2)
    jax.block_until_ready(got2)
    ref2 = reference(out2, tgt2, 5.0, 100)
    assert jnp.allclose(got2, ref2, atol=1e-5, rtol=1e-5), (got2, ref2)

    print("KERNEL_OK")
</pallas_src>

<mosaic_0001>
module attributes {stable_mosaic.version = 11 : i64} {
  func.func @_ce_stats_kernel(%arg0: i32, %arg1: i32, %arg2: memref<1x4x2x128xf32, #tpu.memory_space<vmem>>, %arg3: memref<1x2x128xi32, #tpu.memory_space<vmem>>, %arg4: memref<1x2x128xf32, #tpu.memory_space<vmem>>, %arg5: memref<1x1x1x128xf32, #tpu.memory_space<vmem>>, %arg6: memref<1x1x1x128xi32, #tpu.memory_space<vmem>>) attributes {dimension_semantics = [#tpu.dimension_semantics<parallel>, #tpu.dimension_semantics<parallel>], iteration_bounds = array<i64: 2, 1>, scalar_prefetch = 0 : i64, scratch_operands = 0 : i64, tpu.core_type = #tpu.core_type<tc>, window_params = [{transform_indices = @transform_0, window_bounds = array<i64: 1, 4, 2, 128>}, {transform_indices = @transform_1, window_bounds = array<i64: 1, 2, 128>}, {transform_indices = @transform_2, window_bounds = array<i64: 1, 2, 128>}, {transform_indices = @transform_3, window_bounds = array<i64: 1, 1, 1, 128>}, {transform_indices = @transform_4, window_bounds = array<i64: 1, 1, 1, 128>}]} {
    %c0 = arith.constant 0 : index
    %c0_0 = arith.constant 0 : index
    %c0_1 = arith.constant 0 : index
    %0 = vector.load %arg3[%c0, %c0_0, %c0_1] : memref<1x2x128xi32, #tpu.memory_space<vmem>>, vector<1x2x128xi32>
    %1 = vector.shape_cast %0 : vector<1x2x128xi32> to vector<2x128xi32>
    %c0_2 = arith.constant 0 : index
    %c0_3 = arith.constant 0 : index
    %c0_4 = arith.constant 0 : index
    %c0_5 = arith.constant 0 : index
    %2 = vector.load %arg2[%c0_2, %c0_3, %c0_4, %c0_5] : memref<1x4x2x128xf32, #tpu.memory_space<vmem>>, vector<1x1x2x128xf32>
    %3 = vector.shape_cast %2 : vector<1x1x2x128xf32> to vector<2x128xf32>
    %c0_6 = arith.constant 0 : index
    %c1 = arith.constant 1 : index
    %c0_7 = arith.constant 0 : index
    %c0_8 = arith.constant 0 : index
    %4 = vector.load %arg2[%c0_6, %c1, %c0_7, %c0_8] : memref<1x4x2x128xf32, #tpu.memory_space<vmem>>, vector<1x1x2x128xf32>
    %5 = vector.shape_cast %4 : vector<1x1x2x128xf32> to vector<2x128xf32>
    %6 = arith.maximumf %3, %5 : vector<2x128xf32>
    %c0_9 = arith.constant 0 : index
    %c2 = arith.constant 2 : index
    %c0_10 = arith.constant 0 : index
    %c0_11 = arith.constant 0 : index
    %7 = vector.load %arg2[%c0_9, %c2, %c0_10, %c0_11] : memref<1x4x2x128xf32, #tpu.memory_space<vmem>>, vector<1x1x2x128xf32>
    %8 = vector.shape_cast %7 : vector<1x1x2x128xf32> to vector<2x128xf32>
    %9 = arith.maximumf %6, %8 : vector<2x128xf32>
    %c0_12 = arith.constant 0 : index
    %c3 = arith.constant 3 : index
    %c0_13 = arith.constant 0 : index
    %c0_14 = arith.constant 0 : index
    %10 = vector.load %arg2[%c0_12, %c3, %c0_13, %c0_14] : memref<1x4x2x128xf32, #tpu.memory_space<vmem>>, vector<1x1x2x128xf32>
    %11 = vector.shape_cast %10 : vector<1x1x2x128xf32> to vector<2x128xf32>
    %12 = arith.maximumf %9, %11 : vector<2x128xf32>
    %cst = arith.constant 0.000000e+00 : f32
    %13 = vector.broadcast %cst : f32 to vector<2x128xf32>
    %cst_15 = arith.constant 0.000000e+00 : f32
    %14 = vector.broadcast %cst_15 : f32 to vector<2x128xf32>
    %c0_16 = arith.constant 0 : index
    %c0_17 = arith.constant 0 : index
    %c0_18 = arith.constant 0 : index
    %c0_19 = arith.constant 0 : index
    %15 = vector.load %arg2[%c0_16, %c0_17, %c0_18, %c0_19] : memref<1x4x2x128xf32, #tpu.memory_space<vmem>>, vector<1x1x2x128xf32>
    %16 = vector.shape_cast %15 : vector<1x1x2x128xf32> to vector<2x128xf32>
    %17 = arith.subf %16, %12 : vector<2x128xf32>
    %18 = math.exp %17 : vector<2x128xf32>
    %19 = arith.addf %13, %18 : vector<2x128xf32>
    %c0_i32 = arith.constant 0 : i32
    %20 = vector.broadcast %c0_i32 : i32 to vector<2x128xi32>
    %21 = arith.cmpi eq, %1, %20 : vector<2x128xi32>
    %cst_20 = arith.constant 0.000000e+00 : f32
    %22 = vector.broadcast %cst_20 : f32 to vector<2x128xf32>
    %23 = arith.select %21, %16, %22 : vector<2x128xi1>, vector<2x128xf32>
    %24 = arith.addf %14, %23 : vector<2x128xf32>
    %c0_21 = arith.constant 0 : index
    %c1_22 = arith.constant 1 : index
    %c0_23 = arith.constant 0 : index
    %c0_24 = arith.constant 0 : index
    %25 = vector.load %arg2[%c0_21, %c1_22, %c0_23, %c0_24] : memref<1x4x2x128xf32, #tpu.memory_space<vmem>>, vector<1x1x2x128xf32>
    %26 = vector.shape_cast %25 : vector<1x1x2x128xf32> to vector<2x128xf32>
    %27 = arith.subf %26, %12 : vector<2x128xf32>
    %28 = math.exp %27 : vector<2x128xf32>
    %29 = arith.addf %19, %28 : vector<2x128xf32>
    %c1_i32 = arith.constant 1 : i32
    %30 = vector.broadcast %c1_i32 : i32 to vector<2x128xi32>
    %31 = arith.cmpi eq, %1, %30 : vector<2x128xi32>
    %cst_25 = arith.constant 0.000000e+00 : f32
    %32 = vector.broadcast %cst_25 : f32 to vector<2x128xf32>
    %33 = arith.select %31, %26, %32 : vector<2x128xi1>, vector<2x128xf32>
    %34 = arith.addf %24, %33 : vector<2x128xf32>
    %c0_26 = arith.constant 0 : index
    %c2_27 = arith.constant 2 : index
    %c0_28 = arith.constant 0 : index
    %c0_29 = arith.constant 0 : index
    %35 = vector.load %arg2[%c0_26, %c2_27, %c0_28, %c0_29] : memref<1x4x2x128xf32, #tpu.memory_space<vmem>>, vector<1x1x2x128xf32>
    %36 = vector.shape_cast %35 : vector<1x1x2x128xf32> to vector<2x128xf32>
    %37 = arith.subf %36, %12 : vector<2x128xf32>
    %38 = math.exp %37 : vector<2x128xf32>
    %39 = arith.addf %29, %38 : vector<2x128xf32>
    %c2_i32 = arith.constant 2 : i32
    %40 = vector.broadcast %c2_i32 : i32 to vector<2x128xi32>
    %41 = arith.cmpi eq, %1, %40 : vector<2x128xi32>
    %cst_30 = arith.constant 0.000000e+00 : f32
    %42 = vector.broadcast %cst_30 : f32 to vector<2x128xf32>
    %43 = arith.select %41, %36, %42 : vector<2x128xi1>, vector<2x128xf32>
    %44 = arith.addf %34, %43 : vector<2x128xf32>
    %c0_31 = arith.constant 0 : index
    %c3_32 = arith.constant 3 : index
    %c0_33 = arith.constant 0 : index
    %c0_34 = arith.constant 0 : index
    %45 = vector.load %arg2[%c0_31, %c3_32, %c0_33, %c0_34] : memref<1x4x2x128xf32, #tpu.memory_space<vmem>>, vector<1x1x2x128xf32>
    %46 = vector.shape_cast %45 : vector<1x1x2x128xf32> to vector<2x128xf32>
    %47 = arith.subf %46, %12 : vector<2x128xf32>
    %48 = math.exp %47 : vector<2x128xf32>
    %49 = arith.addf %39, %48 : vector<2x128xf32>
    %c3_i32 = arith.constant 3 : i32
    %50 = vector.broadcast %c3_i32 : i32 to vector<2x128xi32>
    %51 = arith.cmpi eq, %1, %50 : vector<2x128xi32>
    %cst_35 = arith.constant 0.000000e+00 : f32
    %52 = vector.broadcast %cst_35 : f32 to vector<2x128xf32>
    %53 = arith.select %51, %46, %52 : vector<2x128xi1>, vector<2x128xf32>
    %54 = arith.addf %44, %53 : vector<2x128xf32>
    %55 = math.log %49 : vector<2x128xf32>
    %56 = arith.addf %55, %12 : vector<2x128xf32>
    %57 = arith.subf %56, %54 : vector<2x128xf32>
    %c-100_i32 = arith.constant -100 : i32
    %58 = vector.broadcast %c-100_i32 : i32 to vector<2x128xi32>
    %59 = arith.cmpi eq, %1, %58 : vector<2x128xi32>
    %cst_36 = arith.constant 0.000000e+00 : f32
    %60 = vector.broadcast %cst_36 : f32 to vector<2x128xf32>
    %61 = arith.select %59, %60, %57 : vector<2x128xi1>, vector<2x128xf32>
    %c0_37 = arith.constant 0 : index
    %c0_38 = arith.constant 0 : index
    %c0_39 = arith.constant 0 : index
    %62 = vector.load %arg4[%c0_37, %c0_38, %c0_39] : memref<1x2x128xf32, #tpu.memory_space<vmem>>, vector<1x2x128xf32>
    %63 = vector.shape_cast %62 : vector<1x2x128xf32> to vector<2x128xf32>
    %64 = vector.shape_cast %61 : vector<2x128xf32> to vector<1x2x128xf32>
    tpu.vector_store %arg4[%c0_37, %c0_38, %c0_39], %64 {strides = array<i32>} : memref<1x2x128xf32, #tpu.memory_space<vmem>>, vector<1x2x128xf32>,
    %c256_i32 = arith.constant 256 : i32
    %65 = arith.muli %arg1, %c256_i32 : i32
    %66 = tpu.iota {dimensions = array<i32: 0>} : vector<2x128xi32>
    %c128_i32 = arith.constant 128 : i32
    %67 = vector.broadcast %c128_i32 : i32 to vector<2x128xi32>
    %68 = arith.muli %66, %67 : vector<2x128xi32>
    %69 = vector.broadcast %65 : i32 to vector<2x128xi32>
    %70 = arith.addi %69, %68 : vector<2x128xi32>
    %71 = tpu.iota {dimensions = array<i32: 1>} : vector<2x128xi32>
    %72 = arith.addi %70, %71 : vector<2x128xi32>
    %cst_40 = arith.constant 0.699999988 : f32
    %73 = vector.broadcast %cst_40 : f32 to vector<2x128xf32>
    %74 = arith.cmpf ogt, %61, %73 : vector<2x128xf32>
    %c256_i32_41 = arith.constant 256 : i32
    %75 = vector.broadcast %c256_i32_41 : i32 to vector<2x128xi32>
    %76 = arith.cmpi slt, %72, %75 : vector<2x128xi32>
    %77 = arith.andi %74, %76 : vector<2x128xi1>
    %cst_42 = arith.constant 0.000000e+00 : f32
    %78 = vector.broadcast %cst_42 : f32 to vector<2x128xf32>
    %79 = arith.select %77, %61, %78 : vector<2x128xi1>, vector<2x128xf32>
    %cst_43 = arith.constant dense<0.000000e+00> : vector<128xf32>
    %80 = vector.multi_reduction <add>, %79, %cst_43 [0] : vector<2x128xf32> to vector<128xf32>
    %81 = vector.shape_cast %80 : vector<128xf32> to vector<1x128xf32>
    %c0_44 = arith.constant 0 : index
    %c0_45 = arith.constant 0 : index
    %c0_46 = arith.constant 0 : index
    %c0_47 = arith.constant 0 : index
    %82 = vector.load %arg5[%c0_44, %c0_45, %c0_46, %c0_47] : memref<1x1x1x128xf32, #tpu.memory_space<vmem>>, vector<1x1x1x128xf32>
    %83 = vector.shape_cast %82 : vector<1x1x1x128xf32> to vector<1x128xf32>
    %84 = vector.shape_cast %81 : vector<1x128xf32> to vector<1x1x1x128xf32>
    tpu.vector_store %arg5[%c0_44, %c0_45, %c0_46, %c0_47], %84 {strides = array<i32>} : memref<1x1x1x128xf32, #tpu.memory_space<vmem>>, vector<1x1x1x128xf32>,
    %85 = arith.extui %77 : vector<2x128xi1> to vector<2x128xi32>
    %cst_48 = arith.constant dense<0> : vector<128xi32>
    %86 = vector.multi_reduction <add>, %85, %cst_48 [0] : vector<2x128xi32> to vector<128xi32>
    %87 = vector.shape_cast %86 : vector<128xi32> to vector<1x128xi32>
    %c0_49 = arith.constant 0 : index
    %c0_50 = arith.constant 0 : index
    %c0_51 = arith.constant 0 : index
    %c0_52 = arith.constant 0 : index
    %88 = vector.load %arg6[%c0_49, %c0_50, %c0_51, %c0_52] : memref<1x1x1x128xi32, #tpu.memory_space<vmem>>, vector<1x1x1x128xi32>
    %89 = vector.shape_cast %88 : vector<1x1x1x128xi32> to vector<1x128xi32>
    %90 = vector.shape_cast %87 : vector<1x128xi32> to vector<1x1x1x128xi32>
    tpu.vector_store %arg6[%c0_49, %c0_50, %c0_51, %c0_52], %90 {strides = array<i32>} : memref<1x1x1x128xi32, #tpu.memory_space<vmem>>, vector<1x1x1x128xi32>,
    return
  }
  func.func @transform_0(%arg0: i32, %arg1: i32) -> (i32, i32, i32, i32) {
    %c0_i32 = arith.constant 0 : i32
    %c0_i32_0 = arith.constant 0 : i32
    %c0_i32_1 = arith.constant 0 : i32
    return %arg0, %c0_i32, %arg1, %c0_i32_0 : i32, i32, i32, i32
  }
  func.func @transform_1(%arg0: i32, %arg1: i32) -> (i32, i32, i32) {
    %c0_i32 = arith.constant 0 : i32
    %c0_i32_0 = arith.constant 0 : i32
    return %arg0, %arg1, %c0_i32 : i32, i32, i32
  }
  func.func @transform_2(%arg0: i32, %arg1: i32) -> (i32, i32, i32) {
    %c0_i32 = arith.constant 0 : i32
    %c0_i32_0 = arith.constant 0 : i32
    return %arg0, %arg1, %c0_i32 : i32, i32, i32
  }
  func.func @transform_3(%arg0: i32, %arg1: i32) -> (i32, i32, i32, i32) {
    %c0_i32 = arith.constant 0 : i32
    %c0_i32_0 = arith.constant 0 : i32
    %c0_i32_1 = arith.constant 0 : i32
    return %arg0, %arg1, %c0_i32, %c0_i32_0 : i32, i32, i32, i32
  }
  func.func @transform_4(%arg0: i32, %arg1: i32) -> (i32, i32, i32, i32) {
    %c0_i32 = arith.constant 0 : i32
    %c0_i32_0 = arith.constant 0 : i32
    %c0_i32_1 = arith.constant 0 : i32
    return %arg0, %arg1, %c0_i32, %c0_i32_0 : i32, i32, i32, i32
  }
}

</mosaic_0001>

<llo_original>
// kernel: _lambda_.1
$region0: #{_lambda_.1}
  #allocation0 [shape = 'u32[]', space=smem, size = 0x4, offset = 0x4, fixed_abs, tag = 'smem constant byte address 0x4 - core index']
  #allocation1 [shape = 'u32[144,128]{1,0:T(1,128)}', space=vmem, size = 0x12000, scoped, tag = 'internal scratch']
  %s0 = inlined_call_operand.vmem [shape: f32[2,4,2,128], index: 0, kind: input, shape index: {}]
  %s1 = inlined_call_operand.vmem [shape: s32[2,2,128], index: 1, kind: input, shape index: {}]
  %s2 = inlined_call_operand.vmem [shape: f32[2,2,128], index: 2, kind: output, shape index: {0}]
  %s3 = inlined_call_operand.vmem [shape: f32[2,1,1,128], index: 3, kind: output, shape index: {1}]
  %s4 = inlined_call_operand.vmem [shape: s32[2,1,1,128], index: 4, kind: output, shape index: {2}]
  %5 = xla_tuple %s2, %s3, %s4
  %s6 = sld [smem:[#allocation0]]
  $region57: #{_lambda_.1} parent=0
    _
  %s8 = ssub.s32 1, %s6
  %s9 = scalar_select 0, %s8, %s6
  loop: start=0, step=1, limit=4
  $region2: #{_lambda_.1} parent=0 // loop_pre_header
    _
  $region3: #{_lambda_.1} parent=0 // loop_header
    %s11 = sphi 0, %s15
    %p12 = scmp.ge.s32.totalorder %s11, 4
    %s18 = sphi 0, %s30
    %s19 = sphi 0, %s26
    %s20 = sphi 0, %s18
    %s21 = sphi 0, %s19
    %s22 = sphi 0, %s20
    %s23 = sphi 0, %s21
    %s35 = sphi 0, %s37
    %s38 = sphi 0, %s35
    %s39 = sphi 0, %s38
    %s55 = sphi 0, %s39
    %s63 = sphi 0, %s65
    %s66 = sphi 0, %s63
    %s67 = sphi 0, %s66
    %s83 = sphi 0, %s67
    %s91 = sphi 0, %s93
    %s94 = sphi 0, %s91
    %s95 = sphi 0, %s94
    %s111 = sphi 0, %s95
    %s119 = sphi 0, %s121
    %s122 = sphi 0, %s119
    %s123 = sphi 0, %s122
    %s139 = sphi 0, %s123
    %s147 = sphi 0, %s149
    %s150 = sphi 0, %s147
    %s151 = sphi 0, %s150
    %s167 = sphi 0, %s151
  $region4: #{_lambda_.1} parent=0 // loop_header_branch
    %14 = sbr.rel (%p12) target = $region8
  $region5: #{_lambda_.1} parent=0 // loop_body
    %s16 = ssub.s32 %s11, 1
    %s17 = ssub.s32 %s11, 2
    %s24 = sadd.s32 1, %s19
    %p25 = scmp.ge.s32.totalorder %s24, 1
    %s26 = scalar_select %p25, 0, %s24
    %s27 = sadd.s32 1, %s18
    %s28 = scalar_select %p25, %s27, %s18
    %p29 = scmp.ge.s32.totalorder %s28, 2
    %s30 = scalar_select %p29, 0, %s28
    %s31 = ssub.s32 %s18, %s30
    %s32 = ssub.s32 %s19, %s26
    %s33 = sor.u32 %s31, %s32
    %p34 = scmp.eq.s32.totalorder %s33, 0
    %s36 = sadd.s32 %s35, 1
    %s37 = scalar_select %p34, %s35, %s36
    %p40 = pneg %p34
    %p41 = scmp.eq.s32.totalorder %s11, 1
    %p42 = por %p40, %p41
    %p43 = scmp.ne.s32.totalorder %s35, %s38
    %p44 = scmp.eq.s32.totalorder %s11, 0
    %p45 = por %p43, %p44
    %p46 = scmp.ne.s32.totalorder %s35, %s38
    %p47 = scmp.eq.s32.totalorder %s16, 1
    %p48 = por %p46, %p47
    %p49 = scmp.ne.s32.totalorder %s38, %s39
    %p50 = scmp.eq.s32.totalorder %s16, 0
    %p51 = por %p49, %p50
    %p52 = scmp.ne.s32.totalorder %s38, %s39
    %p53 = scmp.eq.s32.totalorder %s17, 1
    %p54 = por %p52, %p53
    %p56 = scmp.ne.s32.totalorder %s39, %s55
    %p57 = scmp.eq.s32.totalorder %s17, 0
    %p58 = por %p56, %p57
    %s59 = ssub.s32 %s18, %s30
    %s60 = ssub.s32 %s19, %s26
    %s61 = sor.u32 %s59, %s60
    %p62 = scmp.eq.s32.totalorder %s61, 0
    %s64 = sadd.s32 %s63, 1
    %s65 = scalar_select %p62, %s63, %s64
    %p68 = pneg %p62
    %p69 = scmp.eq.s32.totalorder %s11, 1
    %p70 = por %p68, %p69
    %p71 = scmp.ne.s32.totalorder %s63, %s66
    %p72 = scmp.eq.s32.totalorder %s11, 0
    %p73 = por %p71, %p72
    %p74 = scmp.ne.s32.totalorder %s63, %s66
    %p75 = scmp.eq.s32.totalorder %s16, 1
    %p76 = por %p74, %p75
    %p77 = scmp.ne.s32.totalorder %s66, %s67
    %p78 = scmp.eq.s32.totalorder %s16, 0
    %p79 = por %p77, %p78
    %p80 = scmp.ne.s32.totalorder %s66, %s67
    %p81 = scmp.eq.s32.totalorder %s17, 1
    %p82 = por %p80, %p81
    %p84 = scmp.ne.s32.totalorder %s67, %s83
    %p85 = scmp.eq.s32.totalorder %s17, 0
    %p86 = por %p84, %p85
    %s87 = ssub.s32 %s18, %s30
    %s88 = ssub.s32 %s19, %s26
    %s89 = sor.u32 %s87, %s88
    %p90 = scmp.eq.s32.totalorder %s89, 0
    %s92 = sadd.s32 %s91, 1
    %s93 = scalar_select %p90, %s91, %s92
    %p96 = pneg %p90
    %p97 = scmp.eq.s32.totalorder %s11, 1
    %p98 = por %p96, %p97
    %p99 = scmp.ne.s32.totalorder %s91, %s94
    %p100 = scmp.eq.s32.totalorder %s11, 0
    %p101 = por %p99, %p100
    %p102 = scmp.ne.s32.totalorder %s91, %s94
    %p103 = scmp.eq.s32.totalorder %s16, 1
    %p104 = por %p102, %p103
    %p105 = scmp.ne.s32.totalorder %s94, %s95
    %p106 = scmp.eq.s32.totalorder %s16, 0
    %p107 = por %p105, %p106
    %p108 = scmp.ne.s32.totalorder %s94, %s95
    %p109 = scmp.eq.s32.totalorder %s17, 1
    %p110 = por %p108, %p109
    %p112 = scmp.ne.s32.totalorder %s95, %s111
    %p113 = scmp.eq.s32.totalorder %s17, 0
    %p114 = por %p112, %p113
    %s115 = ssub.s32 %s18, %s30
    %s116 = ssub.s32 %s19, %s26
    %s117 = sor.u32 %s115, %s116
    %p118 = scmp.eq.s32.totalorder %s117, 0
    %s120 = sadd.s32 %s119, 1
    %s121 = scalar_select %p118, %s119, %s120
    %p124 = pneg %p118
    %p125 = scmp.eq.s32.totalorder %s11, 1
    %p126 = por %p124, %p125
    %p127 = scmp.ne.s32.totalorder %s119, %s122
    %p128 = scmp.eq.s32.totalorder %s11, 0
    %p129 = por %p127, %p128
    %p130 = scmp.ne.s32.totalorder %s119, %s122
    %p131 = scmp.eq.s32.totalorder %s16, 1
    %p132 = por %p130, %p131
    %p133 = scmp.ne.s32.totalorder %s122, %s123
    %p134 = scmp.eq.s32.totalorder %s16, 0
    %p135 = por %p133, %p134
    %p136 = scmp.ne.s32.totalorder %s122, %s123
    %p137 = scmp.eq.s32.totalorder %s17, 1
    %p138 = por %p136, %p137
    %p140 = scmp.ne.s32.totalorder %s123, %s139
    %p141 = scmp.eq.s32.totalorder %s17, 0
    %p142 = por %p140, %p141
    %s143 = ssub.s32 %s18, %s30
    %s144 = ssub.s32 %s19, %s26
    %s145 = sor.u32 %s143, %s144
    %p146 = scmp.eq.s32.totalorder %s145, 0
    %s148 = sadd.s32 %s147, 1
    %s149 = scalar_select %p146, %s147, %s148
    %p152 = pneg %p146
    %p153 = scmp.eq.s32.totalorder %s11, 1
    %p154 = por %p152, %p153
    %p155 = scmp.ne.s32.totalorder %s147, %s150
    %p156 = scmp.eq.s32.totalorder %s11, 0
    %p157 = por %p155, %p156
    %p158 = scmp.ne.s32.totalorder %s147, %s150
    %p159 = scmp.eq.s32.totalorder %s16, 1
    %p160 = por %p158, %p159
    %p161 = scmp.ne.s32.totalorder %s150, %s151
    %p162 = scmp.eq.s32.totalorder %s16, 0
    %p163 = por %p161, %p162
    %p164 = scmp.ne.s32.totalorder %s150, %s151
    %p165 = scmp.eq.s32.totalorder %s17, 1
    %p166 = por %p164, %p165
    %p168 = scmp.ne.s32.totalorder %s151, %s167
    %p169 = scmp.eq.s32.totalorder %s17, 0
    %p170 = por %p168, %p169
    %p171 = scmp.le.s32.totalorder 1, %s11
    %p172 = scmp.lt.s32.totalorder %s11, 3
    %p173 = pnand %p171, %p172
    %p174 = pneg %p173
    // Predicated region
    $region9: #{_lambda_.1} parent=5 // pred_check
      _
    $region10: #{_lambda_.1} parent=5 // pred_check_branch
      %176 = sbr.rel (%p173) target = $region12
    $region11: #{_lambda_.1} parent=5 // pred_region
      %s177 = ssub.s32 %s11, 1
    $region12: #{_lambda_.1} parent=5 // pred_fallthru
      _
    %p178 = scmp.lt.s32.totalorder %s11, 2
    // Predicated region
    $region13: #{_lambda_.1} parent=5 // pred_check
      %p179 = pneg %p178
    $region14: #{_lambda_.1} parent=5 // pred_check_branch
      %181 = sbr.rel (%p179) target = $region16
    $region15: #{_lambda_.1} parent=5 // pred_region
      // Predicated region
      $region17: #{_lambda_.1} parent=15 // pred_check
        %p182 = pneg %p45
      $region18: #{_lambda_.1} parent=15 // pred_check_branch
        %184 = sbr.rel (%p182) target = $region20
      $region19: #{_lambda_.1} parent=15 // pred_region
        %p185 = scmp.lt.s32.totalorder %s18, 1
        %s186 = scalar_select %p185, %s18, 1
        %p187 = scmp.lt.s32.totalorder %s19, 0
        %s188 = scalar_select %p187, %s19, 0
        %s189 = smul.addr %s186, 4
        %s190 = sadd.s32 %s188, %s189
        %s191 = smul.addr %s190, 2
        %s192 = scalar_lea.vmem %s0, %s191
      $region20: #{_lambda_.1} parent=15 // pred_fallthru
        _
      // Predicated region
      $region21: #{_lambda_.1} parent=15 // pred_check
        %p193 = pneg %p73
      $region22: #{_lambda_.1} parent=15 // pred_check_branch
        %195 = sbr.rel (%p193) target = $region24
      $region23: #{_lambda_.1} parent=15 // pred_region
        %p196 = scmp.lt.s32.totalorder %s18, 1
        %s197 = scalar_select %p196, %s18, 1
        %p198 = scmp.lt.s32.totalorder %s19, 0
        %s199 = scalar_select %p198, %s19, 0
        %s200 = sadd.s32 %s199, %s197
        %s201 = smul.addr %s200, 2
        %s202 = scalar_lea.vmem %s1, %s201
      $region24: #{_lambda_.1} parent=15 // pred_fallthru
        _
    $region16: #{_lambda_.1} parent=5 // pred_fallthru
      _
    %p203 = scmp.le.s32.totalorder 1, %s11
    %p204 = scmp.lt.s32.totalorder %s11, 3
    %p205 = pnand %p203, %p204
    %p206 = pneg %p205
    // Predicated region
    $region25: #{_lambda_.1} parent=5 // pred_check
      _
    $region26: #{_lambda_.1} parent=5 // pred_check_branch
      %208 = sbr.rel (%p205) target = $region28
    $region27: #{_lambda_.1} parent=5 // pred_region
      %s209 = ssub.s32 %s11, 1
      %p210 = scmp.lt.s32.totalorder %s20, 1
      %s211 = scalar_select %p210, %s20, 1
      %p212 = scmp.lt.s32.totalorder %s21, 0
      %s213 = scalar_select %p212, %s21, 0
      %s214 = smul.addr %s211, 4
      %s215 = sadd.s32 %s213, %s214
      %s216 = smul.addr %s215, 2
      %s217 = scalar_lea.vmem %s0, %s216
      %p218 = pneg %p51
      %p219 = pneg %p48
      %p220 = scmp.lt.s32.totalorder %s20, 1
      %s221 = scalar_select %p220, %s20, 1
      %p222 = scmp.lt.s32.totalorder %s21, 0
      %s223 = scalar_select %p222, %s21, 0
      %s224 = sadd.s32 %s223, %s221
      %s225 = smul.addr %s224, 2
      %s226 = scalar_lea.vmem %s1, %s225
      %p227 = pneg %p79
      %p228 = pneg %p76
      %p229 = pneg %p107
      %p230 = pneg %p104
      %p231 = scmp.lt.s32.totalorder %s20, 1
      %s232 = scalar_select %p231, %s20, 1
      %p233 = scmp.lt.s32.totalorder %s21, 0
      %s234 = scalar_select %p233, %s21, 0
      %s235 = sadd.s32 %s234, %s232
      %s236 = smul.addr %s235, 2
      %s237 = scalar_lea.vmem %s2, %s236
      %p238 = pneg %p135
      %p239 = pneg %p132
      %p240 = scmp.lt.s32.totalorder %s20, 1
      %s241 = scalar_select %p240, %s20, 1
      %p242 = scmp.lt.s32.totalorder %s21, 0
      %s243 = scalar_select %p242, %s21, 0
      %s244 = sadd.s32 %s243, %s241
      %s245 = scalar_lea.vmem %s3, %s244
      %p246 = pneg %p163
      %p247 = pneg %p160
      %p248 = scmp.lt.s32.totalorder %s20, 1
      %s249 = scalar_select %p248, %s20, 1
      %p250 = scmp.lt.s32.totalorder %s21, 0
      %s251 = scalar_select %p250, %s21, 0
      %s252 = sadd.s32 %s251, %s249
      %s253 = scalar_lea.vmem %s4, %s252
      %p254 = scmp.lt.s32.totalorder %s20, 1
      %s255 = scalar_select %p254, %s20, 1
      %p256 = scmp.lt.s32.totalorder %s21, 0
      %s257 = scalar_select %p256, %s21, 0
      %s258 = smul.addr %s255, 4
      %s259 = sadd.s32 %s257, %s258
      %s260 = smul.addr %s259, 2
      %s261 = scalar_lea.vmem %s0, %s260
      %p262 = scmp.lt.s32.totalorder %s20, 1
      %s263 = scalar_select %p262, %s20, 1
      %p264 = scmp.lt.s32.totalorder %s21, 0
      %s265 = scalar_select %p264, %s21, 0
      %s266 = sadd.s32 %s265, %s263
      %s267 = smul.addr %s266, 2
      %s268 = scalar_lea.vmem %s1, %s267
      %p269 = scmp.lt.s32.totalorder %s20, 1
      %s270 = scalar_select %p269, %s20, 1
      %p271 = scmp.lt.s32.totalorder %s21, 0
      %s272 = scalar_select %p271, %s21, 0
      %s273 = sadd.s32 %s272, %s270
      %s274 = smul.addr %s273, 2
      %s275 = scalar_lea.vmem %s2, %s274
      %p276 = scmp.lt.s32.totalorder %s20, 1
      %s277 = scalar_select %p276, %s20, 1
      %p278 = scmp.lt.s32.totalorder %s21, 0
      %s279 = scalar_select %p278, %s21, 0
      %s280 = sadd.s32 %s279, %s277
      %s281 = scalar_lea.vmem %s3, %s280
      %p282 = scmp.lt.s32.totalorder %s20, 1
      %s283 = scalar_select %p282, %s20, 1
      %p284 = scmp.lt.s32.totalorder %s21, 0
      %s285 = scalar_select %p284, %s21, 0
      %s286 = sadd.s32 %s285, %s283
      %s287 = scalar_lea.vmem %s4, %s286
      %v288 = vld [vmem:[%s268] sm:$0x3]
      %v289 = vld [vmem:[%s261] sm:$0x3]
      %s290 = scalar_lea.vmem %s261, 2
      %v291 = vld [vmem:[%s290] sm:$0x3]
      %v292 = vmax.f32 %v289, %v291
      %s293 = scalar_lea.vmem %s261, 4
      %v294 = vld [vmem:[%s293] sm:$0x3]
      %v295 = vmax.f32 %v292, %v294
      %s296 = scalar_lea.vmem %s261, 6
      %v297 = vld [vmem:[%s296] sm:$0x3]
      %v298 = vmax.f32 %v295, %v297
      %v299 = vsub.f32 %v289, %v298
      %v300 = vmul.f32 %v299, 1.442695
      %v301 = vpow.pop %v300
      %v302 = vadd.f32 %v301, 0.0
      %vm303 = vcmp.eq.s32.totalorder %v288, 0
      %v304 = vsel %vm303, %v289, 0.0
      %v305 = vadd.f32 %v304, 0.0
      %v306 = vsub.f32 %v291, %v298
      %v307 = vmul.f32 %v306, 1.442695
      %v308 = vpow.pop %v307
      %v309 = vadd.f32 %v302, %v308
      %vm310 = vcmp.eq.s32.totalorder %v288, 1
      %v311 = vsel %vm310, %v291, 0.0
      %v312 = vadd.f32 %v305, %v311
      %v313 = vsub.f32 %v294, %v298
      %v314 = vmul.f32 %v313, 1.442695
      %v315 = vpow.pop %v314
      %v316 = vadd.f32 %v309, %v315
      %vm317 = vcmp.eq.s32.totalorder %v288, 2
      %v318 = vsel %vm317, %v294, 0.0
      %v319 = vadd.f32 %v312, %v318
      %v320 = vsub.f32 %v297, %v298
      %v321 = vmul.f32 %v320, 1.442695
      %v322 = vpow.pop %v321
      %v323 = vadd.f32 %v316, %v322
      %vm324 = vcmp.eq.s32.totalorder %v288, 3
      %v325 = vsel %vm324, %v297, 0.0
      %v326 = vadd.f32 %v319, %v325
      %v327 = vlog2.pop %v323
      %v328 = vmul.f32 %v327, 0.6931472
      %v329 = vadd.f32 %v328, %v298
      %v330 = vsub.f32 %v329, %v326
      %vm331 = vcmp.eq.s32.totalorder %v288, 4294967196
      %v332 = vsel %vm331, 0.0, %v330
      %333 = vst [vmem:[%s275] sm:$0x3] %v332
      %s334 = smul.u32 %s21, 256
      %v335 = vlaneseq
      %v336 = vshrl.u32 %v335, 7
      %v337 = vmul.u32 %v336, 128
      %v338 = vstv %s334
      %v339 = vadd.s32 %v338, %v337
      %v340 = vlaneseq
      %v341 = vand.u32 %v340, 127
      %v342 = vadd.s32 %v339, %v341
      %vm343 = vcmp.gt.f32.partialorder %v332, 0.7
      %vm344 = vcmp.lt.s32.totalorder %v342, 256
      %vm345 = vmand %vm343, %vm344
      %v346 = vsel %vm345, %v332, 0.0
      %vm347 = vcmask 1041408
      %v348 = vsel %vm347, %v346, 0.0
      %v349 = vrot.slane %v348, 4
      %v350 = vadd.f32 %v348, %v349
      %v351 = vrot.slane %v350, 2
      %v352 = vadd.f32 %v350, %v351
      %v353 = vrot.slane %v352, 1
      %v354 = vadd.f32 %v352, %v353
      %355 = vst [vmem:[%s281] sm:$0x1] %v354
      %v356 = vsel %vm345, 1, 0
      %v357 = vsel %vm347, %v356, 0
      %v358 = vrot.slane %v357, 4
      %v359 = vadd.s32 %v357, %v358
      %v360 = vrot.slane %v359, 2
      %v361 = vadd.s32 %v359, %v360
      %v362 = vrot.slane %v361, 1
      %v363 = vadd.s32 %v361, %v362
      %364 = vst [vmem:[%s287] sm:$0x1] %v363
      %p365 = scmp.lt.s32.totalorder %s20, 1
      %s366 = scalar_select %p365, %s20, 1
      %p367 = scmp.lt.s32.totalorder %s21, 0
      %s368 = scalar_select %p367, %s21, 0
      %s369 = sadd.s32 %s368, %s366
      %s370 = smul.addr %s369, 2
      %s371 = scalar_lea.vmem %s2, %s370
      %p372 = scmp.lt.s32.totalorder %s20, 1
      %s373 = scalar_select %p372, %s20, 1
      %p374 = scmp.lt.s32.totalorder %s21, 0
      %s375 = scalar_select %p374, %s21, 0
      %s376 = sadd.s32 %s375, %s373
      %s377 = scalar_lea.vmem %s3, %s376
      %p378 = scmp.lt.s32.totalorder %s20, 1
      %s379 = scalar_select %p378, %s20, 1
      %p380 = scmp.lt.s32.totalorder %s21, 0
      %s381 = scalar_select %p380, %s21, 0
      %s382 = sadd.s32 %s381, %s379
      %s383 = scalar_lea.vmem %s4, %s382
      // Predicated region
      $region29: #{_lambda_.1} parent=27 // pred_check
        %p384 = pneg %p104
      $region30: #{_lambda_.1} parent=27 // pred_check_branch
        %386 = sbr.rel (%p384) target = $region32
      $region31: #{_lambda_.1} parent=27 // pred_region
        _
      $region32: #{_lambda_.1} parent=27 // pred_fallthru
        _
      // Predicated region
      $region33: #{_lambda_.1} parent=27 // pred_check
        %p387 = pneg %p132
      $region34: #{_lambda_.1} parent=27 // pred_check_branch
        %389 = sbr.rel (%p387) target = $region36
      $region35: #{_lambda_.1} parent=27 // pred_region
        _
      $region36: #{_lambda_.1} parent=27 // pred_fallthru
        _
      // Predicated region
      $region37: #{_lambda_.1} parent=27 // pred_check
        %p390 = pneg %p160
      $region38: #{_lambda_.1} parent=27 // pred_check_branch
        %392 = sbr.rel (%p390) target = $region40
      $region39: #{_lambda_.1} parent=27 // pred_region
        _
      $region40: #{_lambda_.1} parent=27 // pred_fallthru
        _
    $region28: #{_lambda_.1} parent=5 // pred_fallthru
      _
    %p393 = scmp.le.s32.totalorder 2, %s11
    // Predicated region
    $region41: #{_lambda_.1} parent=5 // pred_check
      %p394 = pneg %p393
    $region42: #{_lambda_.1} parent=5 // pred_check_branch
      %396 = sbr.rel (%p394) target = $region44
    $region43: #{_lambda_.1} parent=5 // pred_region
      %s397 = ssub.s32 %s11, 2
      // Predicated region
      $region45: #{_lambda_.1} parent=43 // pred_check
        %p398 = pneg %p110
      $region46: #{_lambda_.1} parent=43 // pred_check_branch
        %400 = sbr.rel (%p398) target = $region48
      $region47: #{_lambda_.1} parent=43 // pred_region
        %p401 = scmp.lt.s32.totalorder %s22, 1
        %s402 = scalar_select %p401, %s22, 1
        %p403 = scmp.lt.s32.totalorder %s23, 0
        %s404 = scalar_select %p403, %s23, 0
        %s405 = sadd.s32 %s404, %s402
        %s406 = smul.addr %s405, 2
        %s407 = scalar_lea.vmem %s2, %s406
      $region48: #{_lambda_.1} parent=43 // pred_fallthru
        _
      // Predicated region
      $region49: #{_lambda_.1} parent=43 // pred_check
        %p408 = pneg %p138
      $region50: #{_lambda_.1} parent=43 // pred_check_branch
        %410 = sbr.rel (%p408) target = $region52
      $region51: #{_lambda_.1} parent=43 // pred_region
        %p411 = scmp.lt.s32.totalorder %s22, 1
        %s412 = scalar_select %p411, %s22, 1
        %p413 = scmp.lt.s32.totalorder %s23, 0
        %s414 = scalar_select %p413, %s23, 0
        %s415 = sadd.s32 %s414, %s412
        %s416 = scalar_lea.vmem %s3, %s415
      $region52: #{_lambda_.1} parent=43 // pred_fallthru
        _
      // Predicated region
      $region53: #{_lambda_.1} parent=43 // pred_check
        %p417 = pneg %p166
      $region54: #{_lambda_.1} parent=43 // pred_check_branch
        %419 = sbr.rel (%p417) target = $region56
      $region55: #{_lambda_.1} parent=43 // pred_region
        %p420 = scmp.lt.s32.totalorder %s22, 1
        %s421 = scalar_select %p420, %s22, 1
        %p422 = scmp.lt.s32.totalorder %s23, 0
        %s423 = scalar_select %p422, %s23, 0
        %s424 = sadd.s32 %s423, %s421
        %s425 = scalar_lea.vmem %s4, %s424
      $region56: #{_lambda_.1} parent=43 // pred_fallthru
        _
    $region44: #{_lambda_.1} parent=5 // pred_fallthru
      _
  $region6: #{_lambda_.1} parent=0 // loop_footer
    %s15 = sadd.s32 1, %s11
  $region7: #{_lambda_.1} parent=0 // loop_footer_branch
    %10 = sbr.rel target = $region3
  $region8: #{_lambda_.1} parent=0 // loop_exit
    _

</llo_original>
